<compile_context>
chip_gen: v7x
topology: tpu7x:2x2x1
jax: 0.10.0
libtpu: 0.0.40
codegen_flags: <defaults>
</compile_context>

<pallas_src>
import functools

import jax
import jax.numpy as jnp
from jax.experimental import pallas as pl
from jax.experimental.pallas import tpu as pltpu

NUM_CLASSES = 5
LANE = 128          # lane-dense padded class width for the inference output
_MAX_TILE = 1024    # measured mem-bound scaling: 512 ~85%, 1024 ~86% of roofline


def _round_up(n, m):
    return ((n + m - 1) // m) * m


def _pad_rows(a, target_rows):
    pad = target_rows - a.shape[0]
    if pad:
        a = jnp.pad(a, ((0, pad),) + ((0, 0),) * (a.ndim - 1))
    return a


def _vmem_capacity_bytes():
    try:
        return int(pltpu.get_tpu_info().vmem_capacity_bytes)
    except Exception:
        return 64 << 20            # conservative fallback (v7x per-core VMEM)


def _vmem_limit_bytes():
    # Explicit scoped-VMEM limit (default is only 16 MiB on v5e / 32 MiB on
    # v6e+v7x); raise it with headroom so big batch tiles keep 2-deep
    # pipelining alive on every generation.
    return int(min(3 * _vmem_capacity_bytes() // 4, 96 << 20))


def _pick_tile(B, D, c_cols, extra_row_bytes=0):
    """VMEM-budgeted batch tile (multiple of 8) with minimal padding.

    Budget: x double-buffer (2*TB*D*4) + output double-buffer (2*TB*c_cols*4)
    + per-row extras (e.g. int32 labels), with the grid-invariant weight/bias
    double-buffers charged up-front.  The tile is then shrunk so the batch is
    split as evenly as possible (only a few dead pad rows, no jnp.pad blow-up).
    """
    budget = (3 * _vmem_limit_bytes()) // 4
    fixed = 2 * (D * c_cols + c_cols) * 4                # wt + bias buffers
    per_row = 2 * (D + c_cols) * 4 + extra_row_bytes     # x + out (+ labels)
    cap = (budget - fixed) // max(per_row, 1)
    cap = (max(cap, 8) // 8) * 8
    cap = max(8, min(cap, _MAX_TILE, _round_up(B, 8)))
    n_tiles = -(-B // cap)                               # ceil
    tb = _round_up(-(-B // n_tiles), 8)
    return tb


# ----------------------------------------------------------------------------
# Kernel 1: fused Linear + sigmoid (inference), lane-dense (TB, 128) output.
# ----------------------------------------------------------------------------
def _linear_sigmoid_kernel(x_ref, wt_ref, b_ref, o_ref):
    # x: (TB, D)  wt: (D, 128)  b: (1, 128)  ->  o: (TB, 128)
    logits = jnp.dot(x_ref[...], wt_ref[...], preferred_element_type=jnp.float32)
    o_ref[...] = jax.nn.sigmoid(logits + b_ref[...]).astype(o_ref.dtype)


def linear_sigmoid(x, w, b):
    B, D = x.shape
    C = w.shape[0]
    TB = _pick_tile(B, D, LANE)
    Bp = _round_up(B, TB)

    xp = _pad_rows(x, Bp)
    # hoisted transpose + zero class padding 5 -> 128: aligned MXU output tile,
    # full-width (unmasked) output stores; padded columns are sliced off below.
    wt = jnp.pad(jnp.transpose(w), ((0, 0), (0, LANE - C)))
    b2d = jnp.pad(b.reshape(1, C), ((0, 0), (0, LANE - C)))

    cost = pl.CostEstimate(
        flops=2 * Bp * D * LANE,
        transcendentals=Bp * LANE,                         # sigmoid
        bytes_accessed=(Bp * D + D * LANE + LANE + Bp * LANE) * 4,
    )

    out = pl.pallas_call(
        _linear_sigmoid_kernel,
        out_shape=jax.ShapeDtypeStruct((Bp, LANE), jnp.float32),
        grid_spec=pltpu.PrefetchScalarGridSpec(
            num_scalar_prefetch=0,
            grid=(Bp // TB,),
            in_specs=[
                pl.BlockSpec((TB, D), lambda i: (i, 0)),
                pl.BlockSpec((D, LANE), lambda i: (0, 0)),
                pl.BlockSpec((1, LANE), lambda i: (0, 0)),
            ],
            out_specs=pl.BlockSpec((TB, LANE), lambda i: (i, 0)),
        ),
        compiler_params=pltpu.CompilerParams(
            dimension_semantics=("parallel",),
            vmem_limit_bytes=_vmem_limit_bytes(),
        ),
        cost_estimate=cost,
    )(xp, wt, b2d)
    return out[:B, :C]


# ----------------------------------------------------------------------------
# Kernel 2: fused training path — per-row losses
#   loss_i = logsumexp(sigmoid(x_i @ W^T + b)) - sigmoid(x_i @ W^T + b)[y_i]
# (CE applied to the sigmoid output, exactly mirroring the PyTorch reference.)
# Batch axis is "parallel"; the trivial mean over B floats is done in XLA.
# ----------------------------------------------------------------------------
def _fused_ce_row_loss_kernel(x_ref, wt_ref, b_ref, y_ref, o_ref):
    logits = jnp.dot(x_ref[...], wt_ref[...], preferred_element_type=jnp.float32)
    p = jax.nn.sigmoid(logits + b_ref[...])                     # (TB, C) in (0, 1)

    # logsumexp over classes; p is bounded so no max-subtraction is needed
    lse = jnp.log(jnp.sum(jnp.exp(p), axis=-1, keepdims=True))  # (TB, 1)

    # gather p[i, y[i]] via a one-hot select (no dynamic gather on TPU)
    col = jax.lax.broadcasted_iota(jnp.int32, p.shape, 1)
    picked = jnp.sum(jnp.where(col == y_ref[...], p, 0.0), axis=-1, keepdims=True)

    o_ref[...] = lse - picked                                   # per-row loss


def fused_linear_sigmoid_ce(x, w, b, y):
    B, D = x.shape
    C = w.shape[0]
    TB = _pick_tile(B, D, C, extra_row_bytes=16)   # + int32 labels + (TB,1) out
    Bp = _round_up(B, TB)

    xp = _pad_rows(x, Bp)
    yp = _pad_rows(y.astype(jnp.int32).reshape(B, 1), Bp)
    wt = jnp.transpose(w)                          # (D, C) — unpadded (internal only)
    b2d = b.reshape(1, C)

    cost = pl.CostEstimate(
        flops=2 * Bp * D * C + 8 * Bp * C,
        transcendentals=2 * Bp * C + Bp,           # sigmoid + exp + log
        bytes_accessed=(Bp * D + D * C + C + Bp * 2) * 4,
    )

    losses = pl.pallas_call(
        _fused_ce_row_loss_kernel,
        out_shape=jax.ShapeDtypeStruct((Bp, 1), jnp.float32),
        grid_spec=pltpu.PrefetchScalarGridSpec(
            num_scalar_prefetch=0,
            grid=(Bp // TB,),
            in_specs=[
                pl.BlockSpec((TB, D), lambda i: (i, 0)),
                pl.BlockSpec((D, C), lambda i: (0, 0)),
                pl.BlockSpec((1, C), lambda i: (0, 0)),
                pl.BlockSpec((TB, 1), lambda i: (i, 0)),
            ],
            out_specs=pl.BlockSpec((TB, 1), lambda i: (i, 0)),
        ),
        compiler_params=pltpu.CompilerParams(
            dimension_semantics=("parallel",),     # per-row output -> megacore OK
            vmem_limit_bytes=_vmem_limit_bytes(),
        ),
        cost_estimate=cost,
    )(xp, wt, b2d, yp)
    # mean over the real rows (padded rows are simply sliced away)
    return jnp.mean(losses[:B, 0])


# ----------------------------------------------------------------------------
# Module wrapper
# ----------------------------------------------------------------------------
def torch_model_forward(params, x, y=None):
    if y is not None:
        return fused_linear_sigmoid_ce(x, params["w"], params["b"], y)
    return linear_sigmoid(x, params["w"], params["b"])


def init_params(key, input_size):
    # deterministic init mimicking nn.Linear's uniform(-1/sqrt(D), 1/sqrt(D))
    kw, kb = jax.random.split(key)
    bound = 1.0 / jnp.sqrt(jnp.float32(input_size))
    w = jax.random.uniform(kw, (NUM_CLASSES, input_size), jnp.float32, -bound, bound)
    b = jax.random.uniform(kb, (NUM_CLASSES,), jnp.float32, -bound, bound)
    return {"w": w, "b": b}


# pure-JAX reference for correctness checking
def _reference_forward(params, x, y=None):
    y_pred = jax.nn.sigmoid(x @ params["w"].T + params["b"])
    if y is None:
        return y_pred
    lse = jax.nn.logsumexp(y_pred, axis=-1)
    picked = jnp.take_along_axis(y_pred, y.reshape(-1, 1), axis=-1)[:, 0]
    return jnp.mean(lse - picked)


if __name__ == "__main__":
    key = jax.random.PRNGKey(0)
    k_param, k_x, k_y = jax.random.split(key, 3)

    batch = 8
    input_size = 32

    params = init_params(k_param, input_size)
    x = jax.random.normal(k_x, (batch, input_size), jnp.float32)
    y = jax.random.randint(k_y, (batch,), 0, NUM_CLASSES, jnp.int32)

    # inference path
    y_pred = jax.block_until_ready(torch_model_forward(params, x))
    assert y_pred.shape == (batch, NUM_CLASSES)
    assert jnp.allclose(y_pred, _reference_forward(params, x), rtol=1e-4, atol=1e-4)

    # training path (fused per-row-loss kernel + XLA mean)
    loss = jax.block_until_ready(torch_model_forward(params, x, y))
    assert loss.shape == ()
    assert jnp.allclose(loss, _reference_forward(params, x, y), rtol=1e-4, atol=1e-4)

    # ragged batch (exercises minimal row padding + wrapper slicing)
    x6, y6 = x[:6], y[:6]
    loss6 = jax.block_until_ready(torch_model_forward(params, x6, y6))
    assert jnp.allclose(loss6, _reference_forward(params, x6, y6), rtol=1e-4, atol=1e-4)
    pred6 = jax.block_until_ready(torch_model_forward(params, x6))
    assert jnp.allclose(pred6, _reference_forward(params, x6), rtol=1e-4, atol=1e-4)

    print("KERNEL_OK")
</pallas_src>

<mosaic_0001>
module attributes {stable_mosaic.version = 11 : i64} {
  func.func @_linear_sigmoid_kernel(%arg0: i32, %arg1: memref<8x32xf32, #tpu.memory_space<vmem>>, %arg2: memref<32x128xf32, #tpu.memory_space<vmem>>, %arg3: memref<1x128xf32, #tpu.memory_space<vmem>>, %arg4: memref<8x128xf32, #tpu.memory_space<vmem>>) attributes {dimension_semantics = [#tpu.dimension_semantics<parallel>], iteration_bounds = array<i64: 1>, scalar_prefetch = 0 : i64, scratch_operands = 0 : i64, tpu.core_type = #tpu.core_type<tc>, window_params = [{transform_indices = @transform_0, window_bounds = array<i64: 8, 32>}, {pipeline_mode = #tpu.pipeline_mode<synchronous>, transform_indices = @transform_1, window_bounds = array<i64: 32, 128>}, {pipeline_mode = #tpu.pipeline_mode<synchronous>, transform_indices = @transform_2, window_bounds = array<i64: 1, 128>}, {transform_indices = @transform_3, window_bounds = array<i64: 8, 128>}]} {
    %c0 = arith.constant 0 : index
    %c0_0 = arith.constant 0 : index
    %0 = vector.load %arg1[%c0, %c0_0] : memref<8x32xf32, #tpu.memory_space<vmem>>, vector<8x32xf32>
    %c0_1 = arith.constant 0 : index
    %c0_2 = arith.constant 0 : index
    %1 = vector.load %arg2[%c0_1, %c0_2] : memref<32x128xf32, #tpu.memory_space<vmem>>, vector<32x128xf32>
    %cst = arith.constant dense<0.000000e+00> : vector<8x128xf32>
    %2 = tpu.matmul %0, %1, %cst {dimension_numbers = #tpu.dot_dimension_numbers<[1], [0], [0], [1], [0, 0, 1, 1], [], []>} : vector<8x32xf32>, vector<32x128xf32>, vector<8x128xf32> -> vector<8x128xf32>
    %c0_3 = arith.constant 0 : index
    %c0_4 = arith.constant 0 : index
    %3 = vector.load %arg3[%c0_3, %c0_4] : memref<1x128xf32, #tpu.memory_space<vmem>>, vector<1x128xf32>
    %4 = vector.broadcast %3 : vector<1x128xf32> to vector<8x128xf32>
    %5 = arith.addf %2, %4 : vector<8x128xf32>
    %6 = arith.negf %5 : vector<8x128xf32>
    %7 = math.exp %6 : vector<8x128xf32>
    %cst_5 = arith.constant 1.000000e+00 : f32
    %8 = vector.broadcast %cst_5 : f32 to vector<8x128xf32>
    %9 = arith.addf %8, %7 : vector<8x128xf32>
    %10 = arith.divf %8, %9 : vector<8x128xf32>
    %c0_6 = arith.constant 0 : index
    %c0_7 = arith.constant 0 : index
    %11 = vector.load %arg4[%c0_6, %c0_7] : memref<8x128xf32, #tpu.memory_space<vmem>>, vector<8x128xf32>
    tpu.vector_store %arg4[%c0_6, %c0_7], %10 {strides = array<i32>} : memref<8x128xf32, #tpu.memory_space<vmem>>, vector<8x128xf32>,
    return
  }
  func.func @transform_0(%arg0: i32) -> (i32, i32) {
    %c0_i32 = arith.constant 0 : i32
    %c0_i32_0 = arith.constant 0 : i32
    return %arg0, %c0_i32 : i32, i32
  }
  func.func @transform_1(%arg0: i32) -> (i32, i32) {
    %c0_i32 = arith.constant 0 : i32
    %c0_i32_0 = arith.constant 0 : i32
    %c0_i32_1 = arith.constant 0 : i32
    return %c0_i32, %c0_i32_0 : i32, i32
  }
  func.func @transform_2(%arg0: i32) -> (i32, i32) {
    %c0_i32 = arith.constant 0 : i32
    %c0_i32_0 = arith.constant 0 : i32
    %c0_i32_1 = arith.constant 0 : i32
    return %c0_i32, %c0_i32_0 : i32, i32
  }
  func.func @transform_3(%arg0: i32) -> (i32, i32) {
    %c0_i32 = arith.constant 0 : i32
    %c0_i32_0 = arith.constant 0 : i32
    return %arg0, %c0_i32 : i32, i32
  }
}

</mosaic_0001>

<llo_original>
// kernel: tpu_custom_call.1
$region0: #{tpu_custom_call.1}
  #allocation0 [shape = 'u32[]', space=smem, size = 0x4, offset = 0x4, fixed_abs, tag = 'smem constant byte address 0x4 - core index']
  #allocation1 [shape = 'u32[144,128]{1,0:T(1,128)}', space=vmem, size = 0x12000, scoped, tag = 'internal scratch']
  %s0 = inlined_call_operand.hbm [shape: f32[8,32], index: 0, kind: input, shape index: {}]
  %s1 = inlined_call_operand.hbm [shape: f32[32,128], index: 1, kind: input, shape index: {}]
  %s2 = inlined_call_operand.vmem [shape: f32[1,128], index: 2, kind: input, shape index: {}]
  %s3 = inlined_call_operand.hbm [shape: f32[8,128], index: 3, kind: output, shape index: {}]
  %s4 = sld [smem:[#allocation0]]
  $region30: #{tpu_custom_call.1} parent=0
    _
  %s6 = ssub.s32 1, %s4
  %s7 = scalar_select 0, %s6, %s4
  $region1: #{tpu_custom_call.1} parent=0
    #allocation2 [shape = 'u8[4096]{0}', space=vmem, size = 0x1000, scoped, tag = 'input window, operand 0, single buffered']
    #allocation3 [shape = 's32[1]{0}', space=sflag, size = 0x4, scoped, tag = 'scoped memory for tpu_custom_call.1']
    #allocation4 [shape = 's32[1]{0}', space=sflag, size = 0x4, scoped, tag = 'scoped memory for tpu_custom_call.1']
    #allocation5 [shape = 'u8[16384]{0}', space=vmem, size = 0x4000, scoped, tag = 'input window, operand 1, single buffered']
    #allocation6 [shape = 's32[1]{0}', space=sflag, size = 0x4, scoped, tag = 'scoped memory for tpu_custom_call.1']
    #allocation7 [shape = 'u8[4096]{0}', space=vmem, size = 0x1000, scoped, tag = 'output window, operand 0, single buffered']
    %8 = vsyncpa [#allocation3], 0
    %9 = vsyncpa [#allocation6], 0
    %10 = vsyncpa [#allocation4], 0
    // Predicated region
    $region2: #{tpu_custom_call.1} parent=1 // pred_check
      _
    $region3: #{tpu_custom_call.1} parent=1 // pred_check_branch
      %12 = sbr.rel (0) target = $region5
    $region4: #{tpu_custom_call.1} parent=1 // pred_region
      %s14 = ssub.s32 128, 128
      %15 = vsyncadd [#allocation3], %s14
      %s17 = sshll.u32 [#allocation2], 4
      %s18 = int_to_ptr.vmem [resolvable:$true] %s17
      %20 = dma.hbm_to_vmem [thread:$0]  %s0, 128, %s18, [#allocation3]
    $region5: #{tpu_custom_call.1} parent=1 // pred_fallthru
      _
    // Predicated region
    $region6: #{tpu_custom_call.1} parent=1 // pred_check
      _
    $region7: #{tpu_custom_call.1} parent=1 // pred_check_branch
      %22 = sbr.rel (0) target = $region9
    $region8: #{tpu_custom_call.1} parent=1 // pred_region
      %s24 = ssub.s32 512, 512
      %25 = vsyncadd [#allocation6], %s24
      %s26 = sshll.u32 [#allocation5], 4
      %s27 = int_to_ptr.vmem [resolvable:$true] %s26
      %32 = dma.hbm_to_vmem [thread:$0]  %s1, 512, %s27, [#allocation6], 128, 128, 8
    $region9: #{tpu_custom_call.1} parent=1 // pred_fallthru
      _
    // Predicated region
    $region10: #{tpu_custom_call.1} parent=1 // pred_check
      _
    $region11: #{tpu_custom_call.1} parent=1 // pred_check_branch
      %34 = sbr.rel (0) target = $region13
    $region12: #{tpu_custom_call.1} parent=1 // pred_region
      _
    $region13: #{tpu_custom_call.1} parent=1 // pred_fallthru
      _
    // Predicated region
    $region14: #{tpu_custom_call.1} parent=1 // pred_check
      _
    $region15: #{tpu_custom_call.1} parent=1 // pred_check_branch
      %36 = sbr.rel (0) target = $region17
    $region16: #{tpu_custom_call.1} parent=1 // pred_region
      %37 = dma.done [#allocation3], 128
    $region17: #{tpu_custom_call.1} parent=1 // pred_fallthru
      _
    // Predicated region
    $region18: #{tpu_custom_call.1} parent=1 // pred_check
      _
    $region19: #{tpu_custom_call.1} parent=1 // pred_check_branch
      %39 = sbr.rel (0) target = $region21
    $region20: #{tpu_custom_call.1} parent=1 // pred_region
      %40 = dma.done [#allocation6], 512
    $region21: #{tpu_custom_call.1} parent=1 // pred_fallthru
      _
    %v41 = vld [vmem:[#allocation2] sm:$0xff]
    %v42 = vld [vmem:[#allocation5] sm:$0xff]
    %v43 = vld [vmem:[#allocation5 + $0x8] sm:$0xff]
    %v44 = vld [vmem:[#allocation5 + $0x10] sm:$0xff]
    %v45 = vld [vmem:[#allocation5 + $0x18] sm:$0xff]
    %v46 = vld [vmem:[%s2] sm:$0x1]
    %v48 = vlaneseq
    %v49 = vshrl.u32 %v48, 7
    %v50 = vsub.s32 0, %v49
    %v51 = vrot.slane %v46, %v50
    %vm53 = vcmask 261120
    %v55 = vsel %vm53, %v41, 0
    %57 = vmatprep.subr.mxu0 0.0
    %58 = vmatpush1.msra.mxu0 %v42
    %59 = vmatprep.subr.mxu0 0.0
    %60 = vmatpush1.msra.mxu0 %v43
    %61 = vmatprep.subr.mxu0 0.0
    %62 = vmatpush1.msra.mxu0 %v44
    %63 = vmatprep.subr.mxu0 0.0
    %64 = vmatpush1.msra.mxu0 %v45
    %65 = vmatprep.subr.mxu0 0.0
    %66 = vmatpush1.msra.mxu0 0.0
    %67 = vmatprep.subr.mxu0 0.0
    %68 = vmatpush1.msra.mxu0 0.0
    %69 = vmatprep.subr.mxu0 0.0
    %70 = vmatpush1.msra.mxu0 0.0
    %71 = vmatprep.subr.mxu0 0.0
    %72 = vmatpush1.msra.mxu0 0.0
    %73 = vmatprep.subr.mxu0 0.0
    %74 = vmatpush1.msra.mxu0 0.0
    %75 = vmatprep.subr.mxu0 0.0
    %76 = vmatpush1.msra.mxu0 0.0
    %77 = vmatprep.subr.mxu0 0.0
    %78 = vmatpush1.msra.mxu0 0.0
    %79 = vmatprep.subr.mxu0 0.0
    %80 = vmatpush1.msra.mxu0 0.0
    %81 = vmatprep.subr.mxu0 0.0
    %82 = vmatpush1.msra.mxu0 0.0
    %83 = vmatprep.subr.mxu0 0.0
    %84 = vmatpush1.msra.mxu0 0.0
    %85 = vmatprep.subr.mxu0 0.0
    %86 = vmatpush1.msra.mxu0 0.0
    %87 = vmatprep.subr.mxu0 0.0
    %88 = vmatpush1.msra.mxu0 0.0
    %89 = vmatprep.subr.mxu0 0.0
    %90 = vmatpush1.msra.mxu0 0.0
    %91 = vmatprep.subr.mxu0 0.0
    %92 = vmatpush1.msra.mxu0 0.0
    %93 = vmatprep.subr.mxu0 0.0
    %94 = vmatpush1.msra.mxu0 0.0
    %95 = vmatprep.subr.mxu0 0.0
    %96 = vmatpush1.msra.mxu0 0.0
    %97 = vmatprep.subr.mxu0 0.0
    %98 = vmatpush1.msra.mxu0 0.0
    %99 = vmatprep.subr.mxu0 0.0
    %100 = vmatpush1.msra.mxu0 0.0
    %101 = vmatprep.subr.mxu0 0.0
    %102 = vmatpush1.msra.mxu0 0.0
    %103 = vmatprep.subr.mxu0 0.0
    %104 = vmatpush1.msra.mxu0 0.0
    %105 = vmatprep.subr.mxu0 0.0
    %106 = vmatpush1.msra.mxu0 0.0
    %107 = vmatprep.subr.mxu0 0.0
    %108 = vmatpush1.msra.mxu0 0.0
    %109 = vmatprep.subr.mxu0 0.0
    %110 = vmatpush1.msra.mxu0 0.0
    %111 = vmatprep.subr.mxu0 0.0
    %112 = vmatpush1.msra.mxu0 0.0
    %113 = vmatprep.subr.mxu0 0.0
    %114 = vmatpush1.msra.mxu0 0.0
    %115 = vmatprep.subr.mxu0 0.0
    %116 = vmatpush1.msra.mxu0 0.0
    %117 = vmatprep.subr.mxu0 0.0
    %118 = vmatpush1.msra.mxu0 0.0
    %119 = vmatprep.subr.mxu0 0.0
    %120 = vmatpush1.msra.mxu0 0.0
    %121 = vmatprep.mubr.f32.mxu0 0.0
    %122 = vmatmul.mubr.f32.gmra.mrb[0].mxu0 %v55
    %v123 = vpop.f32.mrb[0].mxu0
    %v124 = vadd.f32 %v51, %v123
    %v125 = vpop.f32.mrb[0].mxu0
    %126 = vdwg.mxu0
    %v127 = vxor.u32 %v124, 2147483648
    %v128 = vmul.f32 %v127, 1.442695
    %v129 = vpow.pop %v128
    %v130 = vadd.f32 %v129, 1.0
    %v131 = vrcp.pop %v130
    %v132 = vmul.f32 1.0, %v131
    %133 = vst [vmem:[#allocation7] sm:$0xff] %v132
    // Predicated region
    $region22: #{tpu_custom_call.1} parent=1 // pred_check
      _
    $region23: #{tpu_custom_call.1} parent=1 // pred_check_branch
      %135 = sbr.rel (0) target = $region25
    $region24: #{tpu_custom_call.1} parent=1 // pred_region
      %s137 = ssub.s32 128, 128
      %138 = vsyncadd [#allocation4], %s137
      %s140 = sshll.u32 [#allocation7], 4
      %s141 = int_to_ptr.vmem [resolvable:$true] %s140
      %143 = dma.vmem_to_hbm [thread:$0]  %s141, 128, %s3, [#allocation4]
    $region25: #{tpu_custom_call.1} parent=1 // pred_fallthru
      _
    // Predicated region
    $region26: #{tpu_custom_call.1} parent=1 // pred_check
      _
    $region27: #{tpu_custom_call.1} parent=1 // pred_check_branch
      %145 = sbr.rel (0) target = $region29
    $region28: #{tpu_custom_call.1} parent=1 // pred_region
      %146 = dma.done [#allocation4], 128
    $region29: #{tpu_custom_call.1} parent=1 // pred_fallthru
      _
    %147 = vsyncpa [#allocation3], 1
    %148 = vsyncpa [#allocation6], 1
    %149 = vsyncpa [#allocation4], 1

</llo_original>
